<compile_context>
chip_gen: v5e
topology: v5e:2x2
jax: 0.10.0
libtpu: 0.0.40
codegen_flags: <defaults>
</compile_context>

<pallas_src>
import jax
import jax.numpy as jnp
from jax.experimental import pallas as pl
from jax.experimental.pallas import tpu as pltpu


# ----------------------------------------------------------------------------
# Pallas kernel: fused embedding lookup + GMF + MLP tower + output head.
# All activations are (feature, TB): batch on the lane axis.
# ----------------------------------------------------------------------------
def ncf_kernel(u_idx_ref, i_idx_ref,
               u_tbl_ref, i_tbl_ref,
               w1u_ref, w1i_ref, b1_ref,
               w2_ref, b2_ref, w3_ref, b3_ref,
               wo_mf_ref, wo_h_ref, bo_ref,
               out_ref):
    gdtype = u_tbl_ref.dtype           # storage dtype: exact one-hot row selection
    mdtype = w1u_ref.dtype             # tower matmul dtype (bf16, f32 accumulation)
    tb = u_idx_ref.shape[-1]
    mf_pad = wo_mf_ref.shape[0]        # MF slab rows (padded to a sublane multiple)

    def one_hot(idx_row, n_rows):
        # (n_rows, TB) one-hot columns; exact gather via MXU matmul vs the table.
        rows = jax.lax.broadcasted_iota(jnp.int32, (n_rows, tb), 0)
        return (rows == idx_row).astype(gdtype)

    oh_u = one_hot(u_idx_ref[...], u_tbl_ref.shape[1])        # (candidate_num, TB)
    oh_i = one_hot(i_idx_ref[...], i_tbl_ref.shape[1])        # (num_items, TB)

    # Fused gather of [MF | MLP] embeddings per side: (mf_pad + mlp, TB), f32 exact.
    u_emb = jnp.dot(u_tbl_ref[...], oh_u, preferred_element_type=jnp.float32)
    i_emb = jnp.dot(i_tbl_ref[...], oh_i, preferred_element_type=jnp.float32)

    # GMF branch: lane-dense elementwise product in f32 (VPU).
    mf_vec = u_emb[:mf_pad] * i_emb[:mf_pad]                   # (mf_pad, TB)

    # MLP tower. torch.cat([mlp_u, mlp_i]) @ W1 rewritten as two matmuls summed
    # into one f32 accumulator (split weights -> no in-kernel concat).
    mlp_u = u_emb[mf_pad:].astype(mdtype)                      # (mlp, TB)
    mlp_i = i_emb[mf_pad:].astype(mdtype)
    h = (jnp.dot(w1u_ref[...], mlp_u, preferred_element_type=jnp.float32)
         + jnp.dot(w1i_ref[...], mlp_i, preferred_element_type=jnp.float32)
         + b1_ref[...])
    h = jnp.maximum(h, 0.0)                                    # (mlp, TB)
    h = (jnp.dot(w2_ref[...], h.astype(mdtype), preferred_element_type=jnp.float32)
         + b2_ref[...])
    h = jnp.maximum(h, 0.0)                                    # (mlp/2, TB)
    h = (jnp.dot(w3_ref[...], h.astype(mdtype), preferred_element_type=jnp.float32)
         + b3_ref[...])
    h = jnp.maximum(h, 0.0)                                    # (mlp/4, TB)

    # Output head: broadcast-multiply + sublane (XLU) reduce -> lane-dense (1, TB).
    logit = (jnp.sum(mf_vec * wo_mf_ref[...], axis=0, keepdims=True)
             + jnp.sum(h * wo_h_ref[...], axis=0, keepdims=True)
             + bo_ref[...])
    out_ref[...] = jax.nn.sigmoid(logit)


# ----------------------------------------------------------------------------
# Wrapper: weight fusion/transposition, lane-dense batch tiling, pallas_call.
# ----------------------------------------------------------------------------
def _cdiv(a, b):
    return -(-a // b)


def _ceil_to(x, m):
    return _cdiv(x, m) * m


def ncf_forward(user_input, item_input, params, *, block_b=None):
    """NCF forward. user_input/item_input: int (B,). Returns float32 (B,)."""
    mf_dim = params["mf_emb_user"].shape[1]
    mlp_dim = params["mlp_emb_user"].shape[1]
    mf_pad = _ceil_to(mf_dim, 8)          # keep MF/MLP row split sublane-aligned

    def pad_cols(t, n):
        return t if t.shape[1] == n else jnp.pad(t, ((0, 0), (0, n - t.shape[1])))

    # Fused + transposed gather tables: (mf_pad + mlp, n_rows), storage dtype.
    u_tbl_t = jnp.concatenate(
        [pad_cols(params["mf_emb_user"], mf_pad), params["mlp_emb_user"]], axis=1).T
    i_tbl_t = jnp.concatenate(
        [pad_cols(params["mf_emb_item"], mf_pad), params["mlp_emb_item"]], axis=1).T

    # Tower weights transposed for y = W_t @ x, pre-cast to bf16 for the MXU.
    w1u_t = params["w1"][:mlp_dim].T.astype(jnp.bfloat16)      # (mlp, mlp)
    w1i_t = params["w1"][mlp_dim:].T.astype(jnp.bfloat16)      # (mlp, mlp)
    w2_t = params["w2"].T.astype(jnp.bfloat16)                 # (mlp/2, mlp)
    w3_t = params["w3"].T.astype(jnp.bfloat16)                 # (mlp/4, mlp/2)
    # Biases / head weights as f32 columns (broadcast over lanes inside kernel).
    b1c = params["b1"].reshape(mlp_dim, 1).astype(jnp.float32)
    b2c = params["b2"].reshape(-1, 1).astype(jnp.float32)
    b3c = params["b3"].reshape(-1, 1).astype(jnp.float32)
    wo_mf = jnp.pad(params["wo"][:mf_dim],
                    ((0, mf_pad - mf_dim), (0, 0))).astype(jnp.float32)  # (mf_pad, 1)
    wo_h = params["wo"][mf_dim:].astype(jnp.float32)                     # (mlp/4, 1)
    bo = params["bo"].astype(jnp.float32)                                # (1, 1)

    # Batch tiling: lane-dense tiles (multiple of 128); >=2 blocks when possible
    # so both TensorCores on v7x get work via the parallel grid axis.
    B = user_input.shape[0]
    if block_b is None:
        block_b = 2048
    b128 = _ceil_to(max(B, 1), 128)
    n_blocks = max(2, _cdiv(b128, block_b))
    tb = min(block_b, _ceil_to(_cdiv(b128, n_blocks), 128))
    b_pad = _ceil_to(B, tb)
    grid_b = b_pad // tb

    u = user_input.astype(jnp.int32)
    it = item_input.astype(jnp.int32)
    if b_pad != B:
        u = jnp.pad(u, (0, b_pad - B))
        it = jnp.pad(it, (0, b_pad - B))
    u = u.reshape(grid_b, 1, tb)
    it = it.reshape(grid_b, 1, tb)

    idx_spec = pl.BlockSpec((None, 1, tb), lambda b: (b, 0, 0))

    def resident_spec(a):
        nd = a.ndim
        return pl.BlockSpec(a.shape, lambda b, nd=nd: (0,) * nd)

    resident_operands = (u_tbl_t, i_tbl_t,
                         w1u_t, w1i_t, b1c,
                         w2_t, b2c, w3_t, b3c,
                         wo_mf, wo_h, bo)

    out = pl.pallas_call(
        ncf_kernel,
        out_shape=jax.ShapeDtypeStruct((grid_b, 1, tb), jnp.float32),
        grid=(grid_b,),
        in_specs=[idx_spec, idx_spec] + [resident_spec(a) for a in resident_operands],
        out_specs=pl.BlockSpec((None, 1, tb), lambda b: (b, 0, 0)),
        compiler_params=pltpu.CompilerParams(
            dimension_semantics=("parallel",)),
    )(u, it, *resident_operands)

    # torch.flatten(prediction)
    return out.reshape(-1)[:B]


# ----------------------------------------------------------------------------
# Deterministic parameter construction (shapes follow NCF.__init__).
# ----------------------------------------------------------------------------
def init_params(key, candidate_num, num_items, mf_dim, mlp_dim, dtype=jnp.float32):
    keys = jax.random.split(key, 12)
    u = lambda k, shape, scale=0.1: (
        (jax.random.uniform(k, shape, jnp.float32) * 2.0 - 1.0) * scale).astype(dtype)
    return {
        "mf_emb_user": u(keys[0], (candidate_num, mf_dim)),
        "mf_emb_item": u(keys[1], (num_items, mf_dim)),
        "mlp_emb_user": u(keys[2], (candidate_num, mlp_dim)),
        "mlp_emb_item": u(keys[3], (num_items, mlp_dim)),
        # Linear weights stored as (in, out)  (i.e. torch W.T), bias as (1, out)
        "w1": u(keys[4], (2 * mlp_dim, mlp_dim)),
        "b1": u(keys[5], (1, mlp_dim)),
        "w2": u(keys[6], (mlp_dim, mlp_dim // 2)),
        "b2": u(keys[7], (1, mlp_dim // 2)),
        "w3": u(keys[8], (mlp_dim // 2, mlp_dim // 4)),
        "b3": u(keys[9], (1, mlp_dim // 4)),
        "wo": u(keys[10], (mf_dim + mlp_dim // 4, 1)),
        "bo": u(keys[11], (1, 1)),
    }


def ncf_reference(user_input, item_input, p):
    """Pure-JAX reference (f32 math) mirroring the PyTorch forward."""
    f = lambda x: x.astype(jnp.float32)
    mf = (jnp.take(f(p["mf_emb_user"]), user_input, 0)
          * jnp.take(f(p["mf_emb_item"]), item_input, 0))
    mlp = jnp.concatenate([jnp.take(f(p["mlp_emb_user"]), user_input, 0),
                           jnp.take(f(p["mlp_emb_item"]), item_input, 0)], axis=1)
    mlp = jnp.maximum(mlp @ f(p["w1"]) + f(p["b1"]), 0.0)
    mlp = jnp.maximum(mlp @ f(p["w2"]) + f(p["b2"]), 0.0)
    mlp = jnp.maximum(mlp @ f(p["w3"]) + f(p["b3"]), 0.0)
    pv = jnp.concatenate([mf, mlp], axis=1)
    return jax.nn.sigmoid(pv @ f(p["wo"]) + f(p["bo"])).reshape(-1)


if __name__ == "__main__":
    # Config consistent with the module: candidate_num=32, num_items=64,
    # MF_latent_dim=8, MLP_latent_dim=32. batch=200 exercises padding + grid=2.
    candidate_num, num_items = 32, 64
    mf_dim, mlp_dim = 8, 32
    batch = 200

    key = jax.random.PRNGKey(0)
    kp, ku, ki = jax.random.split(key, 3)
    user_input = jax.random.randint(ku, (batch,), 0, candidate_num, dtype=jnp.int32)
    item_input = jax.random.randint(ki, (batch,), 0, num_items, dtype=jnp.int32)

    # f32 storage path (tower matmuls run bf16 on the MXU -> loosened tolerance).
    params_f32 = init_params(kp, candidate_num, num_items, mf_dim, mlp_dim, jnp.float32)
    pred = jax.block_until_ready(ncf_forward(user_input, item_input, params_f32))
    ref = jax.block_until_ready(ncf_reference(user_input, item_input, params_f32))
    assert pred.shape == (batch,), pred.shape
    assert jnp.allclose(pred, ref, atol=1e-2, rtol=1e-2), (pred, ref)

    # bf16 storage path (halved HBM/VMEM footprint; f32 accumulation in-kernel).
    params_bf16 = init_params(kp, candidate_num, num_items, mf_dim, mlp_dim, jnp.bfloat16)
    pred16 = jax.block_until_ready(ncf_forward(user_input, item_input, params_bf16))
    ref16 = jax.block_until_ready(ncf_reference(user_input, item_input, params_bf16))
    assert pred16.shape == (batch,), pred16.shape
    assert jnp.allclose(pred16, ref16, atol=2e-2, rtol=2e-2), (pred16, ref16)

    # Tiny-batch edge case (single grid block, heavy padding).
    small = jax.block_until_ready(
        ncf_forward(user_input[:5], item_input[:5], params_f32))
    assert small.shape == (5,)
    assert jnp.allclose(small, ref[:5], atol=1e-2, rtol=1e-2), (small, ref[:5])

    print("KERNEL_OK")
</pallas_src>

<mosaic_0001>
module attributes {stable_mosaic.version = 11 : i64} {
  func.func @ncf_kernel(%arg0: i32, %arg1: memref<1x1x128xi32, #tpu.memory_space<vmem>>, %arg2: memref<1x1x128xi32, #tpu.memory_space<vmem>>, %arg3: memref<40x32xf32, #tpu.memory_space<vmem>>, %arg4: memref<40x64xf32, #tpu.memory_space<vmem>>, %arg5: memref<32x32xbf16, #tpu.memory_space<vmem>>, %arg6: memref<32x32xbf16, #tpu.memory_space<vmem>>, %arg7: memref<32x1xf32, #tpu.memory_space<vmem>>, %arg8: memref<16x32xbf16, #tpu.memory_space<vmem>>, %arg9: memref<16x1xf32, #tpu.memory_space<vmem>>, %arg10: memref<8x16xbf16, #tpu.memory_space<vmem>>, %arg11: memref<8x1xf32, #tpu.memory_space<vmem>>, %arg12: memref<8x1xf32, #tpu.memory_space<vmem>>, %arg13: memref<8x1xf32, #tpu.memory_space<vmem>>, %arg14: memref<1x1xf32, #tpu.memory_space<vmem>>, %arg15: memref<1x1x128xf32, #tpu.memory_space<vmem>>) attributes {dimension_semantics = [#tpu.dimension_semantics<parallel>], iteration_bounds = array<i64: 2>, scalar_prefetch = 0 : i64, scratch_operands = 0 : i64, tpu.core_type = #tpu.core_type<tc>, window_params = [{transform_indices = @transform_0, window_bounds = array<i64: 1, 1, 128>}, {transform_indices = @transform_1, window_bounds = array<i64: 1, 1, 128>}, {pipeline_mode = #tpu.pipeline_mode<synchronous>, transform_indices = @transform_2, window_bounds = array<i64: 40, 32>}, {pipeline_mode = #tpu.pipeline_mode<synchronous>, transform_indices = @transform_3, window_bounds = array<i64: 40, 64>}, {pipeline_mode = #tpu.pipeline_mode<synchronous>, transform_indices = @transform_4, window_bounds = array<i64: 32, 32>}, {pipeline_mode = #tpu.pipeline_mode<synchronous>, transform_indices = @transform_5, window_bounds = array<i64: 32, 32>}, {pipeline_mode = #tpu.pipeline_mode<synchronous>, transform_indices = @transform_6, window_bounds = array<i64: 32, 1>}, {pipeline_mode = #tpu.pipeline_mode<synchronous>, transform_indices = @transform_7, window_bounds = array<i64: 16, 32>}, {pipeline_mode = #tpu.pipeline_mode<synchronous>, transform_indices = @transform_8, window_bounds = array<i64: 16, 1>}, {pipeline_mode = #tpu.pipeline_mode<synchronous>, transform_indices = @transform_9, window_bounds = array<i64: 8, 16>}, {pipeline_mode = #tpu.pipeline_mode<synchronous>, transform_indices = @transform_10, window_bounds = array<i64: 8, 1>}, {pipeline_mode = #tpu.pipeline_mode<synchronous>, transform_indices = @transform_11, window_bounds = array<i64: 8, 1>}, {pipeline_mode = #tpu.pipeline_mode<synchronous>, transform_indices = @transform_12, window_bounds = array<i64: 8, 1>}, {pipeline_mode = #tpu.pipeline_mode<synchronous>, transform_indices = @transform_13, window_bounds = array<i64: 1, 1>}, {transform_indices = @transform_14, window_bounds = array<i64: 1, 1, 128>}]} {
    %c0 = arith.constant 0 : index
    %c0_0 = arith.constant 0 : index
    %c0_1 = arith.constant 0 : index
    %0 = vector.load %arg1[%c0, %c0_0, %c0_1] : memref<1x1x128xi32, #tpu.memory_space<vmem>>, vector<1x1x128xi32>
    %1 = vector.shape_cast %0 : vector<1x1x128xi32> to vector<1x128xi32>
    %2 = tpu.iota {dimensions = array<i32: 0>} : vector<32x128xi32>
    %3 = vector.broadcast %1 : vector<1x128xi32> to vector<32x128xi32>
    %4 = arith.cmpi eq, %2, %3 : vector<32x128xi32>
    %5 = arith.extui %4 : vector<32x128xi1> to vector<32x128xi32>
    %6 = arith.sitofp %5 : vector<32x128xi32> to vector<32x128xf32>
    %c0_2 = arith.constant 0 : index
    %c0_3 = arith.constant 0 : index
    %c0_4 = arith.constant 0 : index
    %7 = vector.load %arg2[%c0_2, %c0_3, %c0_4] : memref<1x1x128xi32, #tpu.memory_space<vmem>>, vector<1x1x128xi32>
    %8 = vector.shape_cast %7 : vector<1x1x128xi32> to vector<1x128xi32>
    %9 = tpu.iota {dimensions = array<i32: 0>} : vector<64x128xi32>
    %10 = vector.broadcast %8 : vector<1x128xi32> to vector<64x128xi32>
    %11 = arith.cmpi eq, %9, %10 : vector<64x128xi32>
    %12 = arith.extui %11 : vector<64x128xi1> to vector<64x128xi32>
    %13 = arith.sitofp %12 : vector<64x128xi32> to vector<64x128xf32>
    %c0_5 = arith.constant 0 : index
    %c0_6 = arith.constant 0 : index
    %14 = vector.load %arg3[%c0_5, %c0_6] : memref<40x32xf32, #tpu.memory_space<vmem>>, vector<40x32xf32>
    %cst = arith.constant dense<0.000000e+00> : vector<40x128xf32>
    %15 = tpu.matmul %14, %6, %cst {dimension_numbers = #tpu.dot_dimension_numbers<[1], [0], [0], [1], [0, 0, 1, 1], [], []>} : vector<40x32xf32>, vector<32x128xf32>, vector<40x128xf32> -> vector<40x128xf32>
    %c0_7 = arith.constant 0 : index
    %c0_8 = arith.constant 0 : index
    %16 = vector.load %arg4[%c0_7, %c0_8] : memref<40x64xf32, #tpu.memory_space<vmem>>, vector<40x64xf32>
    %cst_9 = arith.constant dense<0.000000e+00> : vector<40x128xf32>
    %17 = tpu.matmul %16, %13, %cst_9 {dimension_numbers = #tpu.dot_dimension_numbers<[1], [0], [0], [1], [0, 0, 1, 1], [], []>} : vector<40x64xf32>, vector<64x128xf32>, vector<40x128xf32> -> vector<40x128xf32>
    %18 = vector.extract_strided_slice %15 {offsets = [0, 0], sizes = [8, 128], strides = [1, 1]} : vector<40x128xf32> to vector<8x128xf32>
    %19 = vector.extract_strided_slice %17 {offsets = [0, 0], sizes = [8, 128], strides = [1, 1]} : vector<40x128xf32> to vector<8x128xf32>
    %20 = arith.mulf %18, %19 : vector<8x128xf32>
    %21 = vector.extract_strided_slice %15 {offsets = [8, 0], sizes = [32, 128], strides = [1, 1]} : vector<40x128xf32> to vector<32x128xf32>
    %22 = arith.truncf %21 : vector<32x128xf32> to vector<32x128xbf16>
    %23 = vector.extract_strided_slice %17 {offsets = [8, 0], sizes = [32, 128], strides = [1, 1]} : vector<40x128xf32> to vector<32x128xf32>
    %24 = arith.truncf %23 : vector<32x128xf32> to vector<32x128xbf16>
    %c0_10 = arith.constant 0 : index
    %c0_11 = arith.constant 0 : index
    %25 = vector.load %arg5[%c0_10, %c0_11] : memref<32x32xbf16, #tpu.memory_space<vmem>>, vector<32x32xbf16>
    %cst_12 = arith.constant dense<0.000000e+00> : vector<32x128xf32>
    %26 = tpu.matmul %25, %22, %cst_12 {dimension_numbers = #tpu.dot_dimension_numbers<[1], [0], [0], [1], [0, 0, 1, 1], [], []>} : vector<32x32xbf16>, vector<32x128xbf16>, vector<32x128xf32> -> vector<32x128xf32>
    %c0_13 = arith.constant 0 : index
    %c0_14 = arith.constant 0 : index
    %27 = vector.load %arg6[%c0_13, %c0_14] : memref<32x32xbf16, #tpu.memory_space<vmem>>, vector<32x32xbf16>
    %cst_15 = arith.constant dense<0.000000e+00> : vector<32x128xf32>
    %28 = tpu.matmul %27, %24, %cst_15 {dimension_numbers = #tpu.dot_dimension_numbers<[1], [0], [0], [1], [0, 0, 1, 1], [], []>} : vector<32x32xbf16>, vector<32x128xbf16>, vector<32x128xf32> -> vector<32x128xf32>
    %29 = arith.addf %26, %28 : vector<32x128xf32>
    %c0_16 = arith.constant 0 : index
    %c0_17 = arith.constant 0 : index
    %30 = vector.load %arg7[%c0_16, %c0_17] : memref<32x1xf32, #tpu.memory_space<vmem>>, vector<32x1xf32>
    %31 = vector.broadcast %30 : vector<32x1xf32> to vector<32x128xf32>
    %32 = arith.addf %29, %31 : vector<32x128xf32>
    %cst_18 = arith.constant 0.000000e+00 : f32
    %33 = vector.broadcast %cst_18 : f32 to vector<32x128xf32>
    %34 = arith.maximumf %32, %33 : vector<32x128xf32>
    %c0_19 = arith.constant 0 : index
    %c0_20 = arith.constant 0 : index
    %35 = vector.load %arg8[%c0_19, %c0_20] : memref<16x32xbf16, #tpu.memory_space<vmem>>, vector<16x32xbf16>
    %36 = arith.truncf %34 : vector<32x128xf32> to vector<32x128xbf16>
    %cst_21 = arith.constant dense<0.000000e+00> : vector<16x128xf32>
    %37 = tpu.matmul %35, %36, %cst_21 {dimension_numbers = #tpu.dot_dimension_numbers<[1], [0], [0], [1], [0, 0, 1, 1], [], []>} : vector<16x32xbf16>, vector<32x128xbf16>, vector<16x128xf32> -> vector<16x128xf32>
    %c0_22 = arith.constant 0 : index
    %c0_23 = arith.constant 0 : index
    %38 = vector.load %arg9[%c0_22, %c0_23] : memref<16x1xf32, #tpu.memory_space<vmem>>, vector<16x1xf32>
    %39 = vector.broadcast %38 : vector<16x1xf32> to vector<16x128xf32>
    %40 = arith.addf %37, %39 : vector<16x128xf32>
    %cst_24 = arith.constant 0.000000e+00 : f32
    %41 = vector.broadcast %cst_24 : f32 to vector<16x128xf32>
    %42 = arith.maximumf %40, %41 : vector<16x128xf32>
    %c0_25 = arith.constant 0 : index
    %c0_26 = arith.constant 0 : index
    %43 = vector.load %arg10[%c0_25, %c0_26] : memref<8x16xbf16, #tpu.memory_space<vmem>>, vector<8x16xbf16>
    %44 = arith.truncf %42 : vector<16x128xf32> to vector<16x128xbf16>
    %cst_27 = arith.constant dense<0.000000e+00> : vector<8x128xf32>
    %45 = tpu.matmul %43, %44, %cst_27 {dimension_numbers = #tpu.dot_dimension_numbers<[1], [0], [0], [1], [0, 0, 1, 1], [], []>} : vector<8x16xbf16>, vector<16x128xbf16>, vector<8x128xf32> -> vector<8x128xf32>
    %c0_28 = arith.constant 0 : index
    %c0_29 = arith.constant 0 : index
    %46 = vector.load %arg11[%c0_28, %c0_29] : memref<8x1xf32, #tpu.memory_space<vmem>>, vector<8x1xf32>
    %47 = vector.broadcast %46 : vector<8x1xf32> to vector<8x128xf32>
    %48 = arith.addf %45, %47 : vector<8x128xf32>
    %cst_30 = arith.constant 0.000000e+00 : f32
    %49 = vector.broadcast %cst_30 : f32 to vector<8x128xf32>
    %50 = arith.maximumf %48, %49 : vector<8x128xf32>
    %c0_31 = arith.constant 0 : index
    %c0_32 = arith.constant 0 : index
    %51 = vector.load %arg12[%c0_31, %c0_32] : memref<8x1xf32, #tpu.memory_space<vmem>>, vector<8x1xf32>
    %52 = vector.broadcast %51 : vector<8x1xf32> to vector<8x128xf32>
    %53 = arith.mulf %20, %52 : vector<8x128xf32>
    %cst_33 = arith.constant dense<0.000000e+00> : vector<128xf32>
    %54 = vector.multi_reduction <add>, %53, %cst_33 [0] : vector<8x128xf32> to vector<128xf32>
    %55 = vector.shape_cast %54 : vector<128xf32> to vector<1x128xf32>
    %c0_34 = arith.constant 0 : index
    %c0_35 = arith.constant 0 : index
    %56 = vector.load %arg13[%c0_34, %c0_35] : memref<8x1xf32, #tpu.memory_space<vmem>>, vector<8x1xf32>
    %57 = vector.broadcast %56 : vector<8x1xf32> to vector<8x128xf32>
    %58 = arith.mulf %50, %57 : vector<8x128xf32>
    %cst_36 = arith.constant dense<0.000000e+00> : vector<128xf32>
    %59 = vector.multi_reduction <add>, %58, %cst_36 [0] : vector<8x128xf32> to vector<128xf32>
    %60 = vector.shape_cast %59 : vector<128xf32> to vector<1x128xf32>
    %61 = arith.addf %55, %60 : vector<1x128xf32>
    %c0_37 = arith.constant 0 : index
    %c0_38 = arith.constant 0 : index
    %62 = vector.load %arg14[%c0_37, %c0_38] : memref<1x1xf32, #tpu.memory_space<vmem>>, vector<1x1xf32>
    %63 = vector.broadcast %62 : vector<1x1xf32> to vector<1x128xf32>
    %64 = arith.addf %61, %63 : vector<1x128xf32>
    %65 = arith.negf %64 : vector<1x128xf32>
    %66 = math.exp %65 : vector<1x128xf32>
    %cst_39 = arith.constant 1.000000e+00 : f32
    %67 = vector.broadcast %cst_39 : f32 to vector<1x128xf32>
    %68 = arith.addf %67, %66 : vector<1x128xf32>
    %69 = arith.divf %67, %68 : vector<1x128xf32>
    %c0_40 = arith.constant 0 : index
    %c0_41 = arith.constant 0 : index
    %c0_42 = arith.constant 0 : index
    %70 = vector.load %arg15[%c0_40, %c0_41, %c0_42] : memref<1x1x128xf32, #tpu.memory_space<vmem>>, vector<1x1x128xf32>
    %71 = vector.shape_cast %70 : vector<1x1x128xf32> to vector<1x128xf32>
    %72 = vector.shape_cast %69 : vector<1x128xf32> to vector<1x1x128xf32>
    tpu.vector_store %arg15[%c0_40, %c0_41, %c0_42], %72 {strides = array<i32>} : memref<1x1x128xf32, #tpu.memory_space<vmem>>, vector<1x1x128xf32>,
    return
  }
  func.func @transform_0(%arg0: i32) -> (i32, i32, i32) {
    %c0_i32 = arith.constant 0 : i32
    %c0_i32_0 = arith.constant 0 : i32
    %c0_i32_1 = arith.constant 0 : i32
    return %arg0, %c0_i32, %c0_i32_0 : i32, i32, i32
  }
  func.func @transform_1(%arg0: i32) -> (i32, i32, i32) {
    %c0_i32 = arith.constant 0 : i32
    %c0_i32_0 = arith.constant 0 : i32
    %c0_i32_1 = arith.constant 0 : i32
    return %arg0, %c0_i32, %c0_i32_0 : i32, i32, i32
  }
  func.func @transform_2(%arg0: i32) -> (i32, i32) {
    %c0_i32 = arith.constant 0 : i32
    %c0_i32_0 = arith.constant 0 : i32
    %c0_i32_1 = arith.constant 0 : i32
    return %c0_i32, %c0_i32_0 : i32, i32
  }
  func.func @transform_3(%arg0: i32) -> (i32, i32) {
    %c0_i32 = arith.constant 0 : i32
    %c0_i32_0 = arith.constant 0 : i32
    %c0_i32_1 = arith.constant 0 : i32
    return %c0_i32, %c0_i32_0 : i32, i32
  }
  func.func @transform_4(%arg0: i32) -> (i32, i32) {
    %c0_i32 = arith.constant 0 : i32
    %c0_i32_0 = arith.constant 0 : i32
    %c0_i32_1 = arith.constant 0 : i32
    return %c0_i32, %c0_i32_0 : i32, i32
  }
  func.func @transform_5(%arg0: i32) -> (i32, i32) {
    %c0_i32 = arith.constant 0 : i32
    %c0_i32_0 = arith.constant 0 : i32
    %c0_i32_1 = arith.constant 0 : i32
    return %c0_i32, %c0_i32_0 : i32, i32
  }
  func.func @transform_6(%arg0: i32) -> (i32, i32) {
    %c0_i32 = arith.constant 0 : i32
    %c0_i32_0 = arith.constant 0 : i32
    %c0_i32_1 = arith.constant 0 : i32
    return %c0_i32, %c0_i32_0 : i32, i32
  }
  func.func @transform_7(%arg0: i32) -> (i32, i32) {
    %c0_i32 = arith.constant 0 : i32
    %c0_i32_0 = arith.constant 0 : i32
    %c0_i32_1 = arith.constant 0 : i32
    return %c0_i32, %c0_i32_0 : i32, i32
  }
  func.func @transform_8(%arg0: i32) -> (i32, i32) {
    %c0_i32 = arith.constant 0 : i32
    %c0_i32_0 = arith.constant 0 : i32
    %c0_i32_1 = arith.constant 0 : i32
    return %c0_i32, %c0_i32_0 : i32, i32
  }
  func.func @transform_9(%arg0: i32) -> (i32, i32) {
    %c0_i32 = arith.constant 0 : i32
    %c0_i32_0 = arith.constant 0 : i32
    %c0_i32_1 = arith.constant 0 : i32
    return %c0_i32, %c0_i32_0 : i32, i32
  }
  func.func @transform_10(%arg0: i32) -> (i32, i32) {
    %c0_i32 = arith.constant 0 : i32
    %c0_i32_0 = arith.constant 0 : i32
    %c0_i32_1 = arith.constant 0 : i32
    return %c0_i32, %c0_i32_0 : i32, i32
  }
  func.func @transform_11(%arg0: i32) -> (i32, i32) {
    %c0_i32 = arith.constant 0 : i32
    %c0_i32_0 = arith.constant 0 : i32
    %c0_i32_1 = arith.constant 0 : i32
    return %c0_i32, %c0_i32_0 : i32, i32
  }
  func.func @transform_12(%arg0: i32) -> (i32, i32) {
    %c0_i32 = arith.constant 0 : i32
    %c0_i32_0 = arith.constant 0 : i32
    %c0_i32_1 = arith.constant 0 : i32
    return %c0_i32, %c0_i32_0 : i32, i32
  }
  func.func @transform_13(%arg0: i32) -> (i32, i32) {
    %c0_i32 = arith.constant 0 : i32
    %c0_i32_0 = arith.constant 0 : i32
    %c0_i32_1 = arith.constant 0 : i32
    return %c0_i32, %c0_i32_0 : i32, i32
  }
  func.func @transform_14(%arg0: i32) -> (i32, i32, i32) {
    %c0_i32 = arith.constant 0 : i32
    %c0_i32_0 = arith.constant 0 : i32
    %c0_i32_1 = arith.constant 0 : i32
    return %arg0, %c0_i32, %c0_i32_0 : i32, i32, i32
  }
}

</mosaic_0001>

<llo_original>
// kernel: tpu_custom_call.1
$region0: #{tpu_custom_call.1}
  #allocation0 [shape = 'u32[]', space=smem, size = 0x4, offset = 0x4, fixed_abs, tag = 'smem constant byte address 0x4 - core index']
  #allocation1 [shape = 'u32[72,128]{1,0:T(1,128)}', space=vmem, size = 0x9000, scoped, tag = 'internal scratch']
  #allocation2 [shape = 'f32[1,1]{1,0:T(1,128)S(1)}', space=vmem, size = 0x200, scoped, tag = 'scoped memory for tpu_custom_call.1']
  %s0 = inlined_call_operand.vmem [shape: s32[2,1,128], index: 0, kind: input, shape index: {}]
  %s1 = inlined_call_operand.vmem [shape: s32[2,1,128], index: 1, kind: input, shape index: {}]
  %s2 = inlined_call_operand.vmem [shape: f32[40,32], index: 2, kind: input, shape index: {}]
  %s3 = inlined_call_operand.vmem [shape: f32[40,64], index: 3, kind: input, shape index: {}]
  %s4 = inlined_call_operand.vmem [shape: bf16[32,32], index: 4, kind: input, shape index: {}]
  %s5 = inlined_call_operand.vmem [shape: bf16[32,32], index: 5, kind: input, shape index: {}]
  %s6 = inlined_call_operand.vmem [shape: f32[32,1], index: 6, kind: input, shape index: {}]
  %s7 = inlined_call_operand.vmem [shape: bf16[16,32], index: 7, kind: input, shape index: {}]
  %s8 = inlined_call_operand.vmem [shape: f32[16,1], index: 8, kind: input, shape index: {}]
  %s9 = inlined_call_operand.vmem [shape: bf16[8,16], index: 9, kind: input, shape index: {}]
  %s10 = inlined_call_operand.vmem [shape: f32[8,1], index: 10, kind: input, shape index: {}]
  %s11 = inlined_call_operand.vmem [shape: f32[8,1], index: 11, kind: input, shape index: {}]
  %s12 = inlined_call_operand.vmem [shape: f32[8,1], index: 12, kind: input, shape index: {}]
  %s13 = inlined_call_operand.<no memory space> [shape: f32[1,1], index: 13, kind: input, shape index: {}]
  %s14 = inlined_call_operand.hbm [shape: f32[2,1,128], index: 14, kind: output, shape index: {}]
  %s15 = sld [smem:[#allocation0]]
  $region89: #{tpu_custom_call.1} parent=0
    _
  %s17 = ssub.s32 1, %s15
  %s18 = scalar_select 0, %s17, %s15
  %v19 = vstv %s13
  %20 = vst [vmem:[#allocation2] sm:$0x1] %v19
  $region1: #{tpu_custom_call.1} parent=0
    #allocation3 [shape = 'u8[1024]{0}', space=vmem, size = 0x400, scoped, tag = 'output window, operand 0']
    #allocation4 [shape = 's32[2]{0}', space=sflag, size = 0x8, scoped, tag = 'scoped memory for tpu_custom_call.1']
    %21 = vsyncpa [#allocation4], 0
    %s22 = scalar_lea.sflag [#allocation4], 1
    %23 = vsyncpa %s22, 0
    loop: start=0, step=1, limit=4
    $region2: #{tpu_custom_call.1} parent=1 // loop_pre_header
      _
    $region3: #{tpu_custom_call.1} parent=1 // loop_header
      %s25 = sphi 0, %s29
      %p26 = scmp.ge.s32.totalorder %s25, 4
      %s35 = sphi 0, %s37
      %s38 = sphi 0, %s35
      %s39 = sphi 0, %s38
      %s55 = sphi 0, %s39
      %s61 = sphi 0, %s63
      %s64 = sphi 0, %s61
      %s65 = sphi 0, %s64
      %s81 = sphi 0, %s65
      %s85 = sphi 0, %s85
      %s87 = sphi 0, %s85
      %s88 = sphi 0, %s87
      %s102 = sphi 0, %s88
      %s106 = sphi 0, %s106
      %s108 = sphi 0, %s106
      %s109 = sphi 0, %s108
      %s123 = sphi 0, %s109
      %s127 = sphi 0, %s127
      %s129 = sphi 0, %s127
      %s130 = sphi 0, %s129
      %s144 = sphi 0, %s130
      %s148 = sphi 0, %s148
      %s150 = sphi 0, %s148
      %s151 = sphi 0, %s150
      %s165 = sphi 0, %s151
      %s169 = sphi 0, %s169
      %s171 = sphi 0, %s169
      %s172 = sphi 0, %s171
      %s186 = sphi 0, %s172
      %s190 = sphi 0, %s190
      %s192 = sphi 0, %s190
      %s193 = sphi 0, %s192
      %s207 = sphi 0, %s193
      %s211 = sphi 0, %s211
      %s213 = sphi 0, %s211
      %s214 = sphi 0, %s213
      %s228 = sphi 0, %s214
      %s232 = sphi 0, %s232
      %s234 = sphi 0, %s232
      %s235 = sphi 0, %s234
      %s249 = sphi 0, %s235
      %s253 = sphi 0, %s253
      %s255 = sphi 0, %s253
      %s256 = sphi 0, %s255
      %s270 = sphi 0, %s256
      %s274 = sphi 0, %s274
      %s276 = sphi 0, %s274
      %s277 = sphi 0, %s276
      %s291 = sphi 0, %s277
      %s295 = sphi 0, %s295
      %s297 = sphi 0, %s295
      %s298 = sphi 0, %s297
      %s312 = sphi 0, %s298
      %s316 = sphi 0, %s316
      %s318 = sphi 0, %s316
      %s319 = sphi 0, %s318
      %s333 = sphi 0, %s319
      %s339 = sphi 0, %s341
      %s342 = sphi 0, %s339
      %s343 = sphi 0, %s342
      %s359 = sphi 0, %s343
    $region4: #{tpu_custom_call.1} parent=1 // loop_header_branch
      %28 = sbr.rel (%p26) target = $region8
    $region5: #{tpu_custom_call.1} parent=1 // loop_body
      %s30 = ssub.s32 %s25, 1
      %s31 = ssub.s32 %s25, 2
      %s32 = sadd.s32 %s25, 1
      %s33 = ssub.s32 %s25, %s32
      %p34 = scmp.eq.s32.totalorder %s33, 0
      %s36 = sadd.s32 %s35, 1
      %s37 = scalar_select %p34, %s35, %s36
      %p40 = pneg %p34
      %p41 = scmp.eq.s32.totalorder %s25, 1
      %p42 = por %p40, %p41
      %p43 = scmp.ne.s32.totalorder %s35, %s38
      %p44 = scmp.eq.s32.totalorder %s25, 0
      %p45 = por %p43, %p44
      %p46 = scmp.ne.s32.totalorder %s35, %s38
      %p47 = scmp.eq.s32.totalorder %s30, 1
      %p48 = por %p46, %p47
      %p49 = scmp.ne.s32.totalorder %s38, %s39
      %p50 = scmp.eq.s32.totalorder %s30, 0
      %p51 = por %p49, %p50
      %p52 = scmp.ne.s32.totalorder %s38, %s39
      %p53 = scmp.eq.s32.totalorder %s31, 1
      %p54 = por %p52, %p53
      %p56 = scmp.ne.s32.totalorder %s39, %s55
      %p57 = scmp.eq.s32.totalorder %s31, 0
      %p58 = por %p56, %p57
      %s59 = ssub.s32 %s25, %s32
      %p60 = scmp.eq.s32.totalorder %s59, 0
      %s62 = sadd.s32 %s61, 1
      %s63 = scalar_select %p60, %s61, %s62
      %p66 = pneg %p60
      %p67 = scmp.eq.s32.totalorder %s25, 1
      %p68 = por %p66, %p67
      %p69 = scmp.ne.s32.totalorder %s61, %s64
      %p70 = scmp.eq.s32.totalorder %s25, 0
      %p71 = por %p69, %p70
      %p72 = scmp.ne.s32.totalorder %s61, %s64
      %p73 = scmp.eq.s32.totalorder %s30, 1
      %p74 = por %p72, %p73
      %p75 = scmp.ne.s32.totalorder %s64, %s65
      %p76 = scmp.eq.s32.totalorder %s30, 0
      %p77 = por %p75, %p76
      %p78 = scmp.ne.s32.totalorder %s64, %s65
      %p79 = scmp.eq.s32.totalorder %s31, 1
      %p80 = por %p78, %p79
      %p82 = scmp.ne.s32.totalorder %s65, %s81
      %p83 = scmp.eq.s32.totalorder %s31, 0
      %p84 = por %p82, %p83
      %s86 = sadd.s32 %s85, 1
      %p89 = scmp.eq.s32.totalorder %s25, 1
      %p90 = scmp.ne.s32.totalorder %s85, %s87
      %p91 = scmp.eq.s32.totalorder %s25, 0
      %p92 = por %p90, %p91
      %p93 = scmp.ne.s32.totalorder %s85, %s87
      %p94 = scmp.eq.s32.totalorder %s30, 1
      %p95 = por %p93, %p94
      %p96 = scmp.ne.s32.totalorder %s87, %s88
      %p97 = scmp.eq.s32.totalorder %s30, 0
      %p98 = por %p96, %p97
      %p99 = scmp.ne.s32.totalorder %s87, %s88
      %p100 = scmp.eq.s32.totalorder %s31, 1
      %p101 = por %p99, %p100
      %p103 = scmp.ne.s32.totalorder %s88, %s102
      %p104 = scmp.eq.s32.totalorder %s31, 0
      %p105 = por %p103, %p104
      %s107 = sadd.s32 %s106, 1
      %p110 = scmp.eq.s32.totalorder %s25, 1
      %p111 = scmp.ne.s32.totalorder %s106, %s108
      %p112 = scmp.eq.s32.totalorder %s25, 0
      %p113 = por %p111, %p112
      %p114 = scmp.ne.s32.totalorder %s106, %s108
      %p115 = scmp.eq.s32.totalorder %s30, 1
      %p116 = por %p114, %p115
      %p117 = scmp.ne.s32.totalorder %s108, %s109
      %p118 = scmp.eq.s32.totalorder %s30, 0
      %p119 = por %p117, %p118
      %p120 = scmp.ne.s32.totalorder %s108, %s109
      %p121 = scmp.eq.s32.totalorder %s31, 1
      %p122 = por %p120, %p121
      %p124 = scmp.ne.s32.totalorder %s109, %s123
      %p125 = scmp.eq.s32.totalorder %s31, 0
      %p126 = por %p124, %p125
      %s128 = sadd.s32 %s127, 1
      %p131 = scmp.eq.s32.totalorder %s25, 1
      %p132 = scmp.ne.s32.totalorder %s127, %s129
      %p133 = scmp.eq.s32.totalorder %s25, 0
      %p134 = por %p132, %p133
      %p135 = scmp.ne.s32.totalorder %s127, %s129
      %p136 = scmp.eq.s32.totalorder %s30, 1
      %p137 = por %p135, %p136
      %p138 = scmp.ne.s32.totalorder %s129, %s130
      %p139 = scmp.eq.s32.totalorder %s30, 0
      %p140 = por %p138, %p139
      %p141 = scmp.ne.s32.totalorder %s129, %s130
      %p142 = scmp.eq.s32.totalorder %s31, 1
      %p143 = por %p141, %p142
      %p145 = scmp.ne.s32.totalorder %s130, %s144
      %p146 = scmp.eq.s32.totalorder %s31, 0
      %p147 = por %p145, %p146
      %s149 = sadd.s32 %s148, 1
      %p152 = scmp.eq.s32.totalorder %s25, 1
      %p153 = scmp.ne.s32.totalorder %s148, %s150
      %p154 = scmp.eq.s32.totalorder %s25, 0
      %p155 = por %p153, %p154
      %p156 = scmp.ne.s32.totalorder %s148, %s150
      %p157 = scmp.eq.s32.totalorder %s30, 1
      %p158 = por %p156, %p157
      %p159 = scmp.ne.s32.totalorder %s150, %s151
      %p160 = scmp.eq.s32.totalorder %s30, 0
      %p161 = por %p159, %p160
      %p162 = scmp.ne.s32.totalorder %s150, %s151
      %p163 = scmp.eq.s32.totalorder %s31, 1
      %p164 = por %p162, %p163
      %p166 = scmp.ne.s32.totalorder %s151, %s165
      %p167 = scmp.eq.s32.totalorder %s31, 0
      %p168 = por %p166, %p167
      %s170 = sadd.s32 %s169, 1
      %p173 = scmp.eq.s32.totalorder %s25, 1
      %p174 = scmp.ne.s32.totalorder %s169, %s171
      %p175 = scmp.eq.s32.totalorder %s25, 0
      %p176 = por %p174, %p175
      %p177 = scmp.ne.s32.totalorder %s169, %s171
      %p178 = scmp.eq.s32.totalorder %s30, 1
      %p179 = por %p177, %p178
      %p180 = scmp.ne.s32.totalorder %s171, %s172
      %p181 = scmp.eq.s32.totalorder %s30, 0
      %p182 = por %p180, %p181
      %p183 = scmp.ne.s32.totalorder %s171, %s172
      %p184 = scmp.eq.s32.totalorder %s31, 1
      %p185 = por %p183, %p184
      %p187 = scmp.ne.s32.totalorder %s172, %s186
      %p188 = scmp.eq.s32.totalorder %s31, 0
      %p189 = por %p187, %p188
      %s191 = sadd.s32 %s190, 1
      %p194 = scmp.eq.s32.totalorder %s25, 1
      %p195 = scmp.ne.s32.totalorder %s190, %s192
      %p196 = scmp.eq.s32.totalorder %s25, 0
      %p197 = por %p195, %p196
      %p198 = scmp.ne.s32.totalorder %s190, %s192
      %p199 = scmp.eq.s32.totalorder %s30, 1
      %p200 = por %p198, %p199
      %p201 = scmp.ne.s32.totalorder %s192, %s193
      %p202 = scmp.eq.s32.totalorder %s30, 0
      %p203 = por %p201, %p202
      %p204 = scmp.ne.s32.totalorder %s192, %s193
      %p205 = scmp.eq.s32.totalorder %s31, 1
      %p206 = por %p204, %p205
      %p208 = scmp.ne.s32.totalorder %s193, %s207
      %p209 = scmp.eq.s32.totalorder %s31, 0
      %p210 = por %p208, %p209
      %s212 = sadd.s32 %s211, 1
      %p215 = scmp.eq.s32.totalorder %s25, 1
      %p216 = scmp.ne.s32.totalorder %s211, %s213
      %p217 = scmp.eq.s32.totalorder %s25, 0
      %p218 = por %p216, %p217
      %p219 = scmp.ne.s32.totalorder %s211, %s213
      %p220 = scmp.eq.s32.totalorder %s30, 1
      %p221 = por %p219, %p220
      %p222 = scmp.ne.s32.totalorder %s213, %s214
      %p223 = scmp.eq.s32.totalorder %s30, 0
      %p224 = por %p222, %p223
      %p225 = scmp.ne.s32.totalorder %s213, %s214
      %p226 = scmp.eq.s32.totalorder %s31, 1
      %p227 = por %p225, %p226
      %p229 = scmp.ne.s32.totalorder %s214, %s228
      %p230 = scmp.eq.s32.totalorder %s31, 0
      %p231 = por %p229, %p230
      %s233 = sadd.s32 %s232, 1
      %p236 = scmp.eq.s32.totalorder %s25, 1
      %p237 = scmp.ne.s32.totalorder %s232, %s234
      %p238 = scmp.eq.s32.totalorder %s25, 0
      %p239 = por %p237, %p238
      %p240 = scmp.ne.s32.totalorder %s232, %s234
      %p241 = scmp.eq.s32.totalorder %s30, 1
      %p242 = por %p240, %p241
      %p243 = scmp.ne.s32.totalorder %s234, %s235
      %p244 = scmp.eq.s32.totalorder %s30, 0
      %p245 = por %p243, %p244
      %p246 = scmp.ne.s32.totalorder %s234, %s235
      %p247 = scmp.eq.s32.totalorder %s31, 1
      %p248 = por %p246, %p247
      %p250 = scmp.ne.s32.totalorder %s235, %s249
      %p251 = scmp.eq.s32.totalorder %s31, 0
      %p252 = por %p250, %p251
      %s254 = sadd.s32 %s253, 1
      %p257 = scmp.eq.s32.totalorder %s25, 1
      %p258 = scmp.ne.s32.totalorder %s253, %s255
      %p259 = scmp.eq.s32.totalorder %s25, 0
      %p260 = por %p258, %p259
      %p261 = scmp.ne.s32.totalorder %s253, %s255
      %p262 = scmp.eq.s32.totalorder %s30, 1
      %p263 = por %p261, %p262
      %p264 = scmp.ne.s32.totalorder %s255, %s256
      %p265 = scmp.eq.s32.totalorder %s30, 0
      %p266 = por %p264, %p265
      %p267 = scmp.ne.s32.totalorder %s255, %s256
      %p268 = scmp.eq.s32.totalorder %s31, 1
      %p269 = por %p267, %p268
      %p271 = scmp.ne.s32.totalorder %s256, %s270
      %p272 = scmp.eq.s32.totalorder %s31, 0
      %p273 = por %p271, %p272
      %s275 = sadd.s32 %s274, 1
      %p278 = scmp.eq.s32.totalorder %s25, 1
      %p279 = scmp.ne.s32.totalorder %s274, %s276
      %p280 = scmp.eq.s32.totalorder %s25, 0
      %p281 = por %p279, %p280
      %p282 = scmp.ne.s32.totalorder %s274, %s276
      %p283 = scmp.eq.s32.totalorder %s30, 1
      %p284 = por %p282, %p283
      %p285 = scmp.ne.s32.totalorder %s276, %s277
      %p286 = scmp.eq.s32.totalorder %s30, 0
      %p287 = por %p285, %p286
      %p288 = scmp.ne.s32.totalorder %s276, %s277
      %p289 = scmp.eq.s32.totalorder %s31, 1
      %p290 = por %p288, %p289
      %p292 = scmp.ne.s32.totalorder %s277, %s291
      %p293 = scmp.eq.s32.totalorder %s31, 0
      %p294 = por %p292, %p293
      %s296 = sadd.s32 %s295, 1
      %p299 = scmp.eq.s32.totalorder %s25, 1
      %p300 = scmp.ne.s32.totalorder %s295, %s297
      %p301 = scmp.eq.s32.totalorder %s25, 0
      %p302 = por %p300, %p301
      %p303 = scmp.ne.s32.totalorder %s295, %s297
      %p304 = scmp.eq.s32.totalorder %s30, 1
      %p305 = por %p303, %p304
      %p306 = scmp.ne.s32.totalorder %s297, %s298
      %p307 = scmp.eq.s32.totalorder %s30, 0
      %p308 = por %p306, %p307
      %p309 = scmp.ne.s32.totalorder %s297, %s298
      %p310 = scmp.eq.s32.totalorder %s31, 1
      %p311 = por %p309, %p310
      %p313 = scmp.ne.s32.totalorder %s298, %s312
      %p314 = scmp.eq.s32.totalorder %s31, 0
      %p315 = por %p313, %p314
      %s317 = sadd.s32 %s316, 1
      %p320 = scmp.eq.s32.totalorder %s25, 1
      %p321 = scmp.ne.s32.totalorder %s316, %s318
      %p322 = scmp.eq.s32.totalorder %s25, 0
      %p323 = por %p321, %p322
      %p324 = scmp.ne.s32.totalorder %s316, %s318
      %p325 = scmp.eq.s32.totalorder %s30, 1
      %p326 = por %p324, %p325
      %p327 = scmp.ne.s32.totalorder %s318, %s319
      %p328 = scmp.eq.s32.totalorder %s30, 0
      %p329 = por %p327, %p328
      %p330 = scmp.ne.s32.totalorder %s318, %s319
      %p331 = scmp.eq.s32.totalorder %s31, 1
      %p332 = por %p330, %p331
      %p334 = scmp.ne.s32.totalorder %s319, %s333
      %p335 = scmp.eq.s32.totalorder %s31, 0
      %p336 = por %p334, %p335
      %s337 = ssub.s32 %s25, %s32
      %p338 = scmp.eq.s32.totalorder %s337, 0
      %s340 = sadd.s32 %s339, 1
      %s341 = scalar_select %p338, %s339, %s340
      %p344 = pneg %p338
      %p345 = scmp.eq.s32.totalorder %s25, 1
      %p346 = por %p344, %p345
      %p347 = scmp.ne.s32.totalorder %s339, %s342
      %p348 = scmp.eq.s32.totalorder %s25, 0
      %p349 = por %p347, %p348
      %p350 = scmp.ne.s32.totalorder %s339, %s342
      %p351 = scmp.eq.s32.totalorder %s30, 1
      %p352 = por %p350, %p351
      %p353 = scmp.ne.s32.totalorder %s342, %s343
      %p354 = scmp.eq.s32.totalorder %s30, 0
      %p355 = por %p353, %p354
      %p356 = scmp.ne.s32.totalorder %s342, %s343
      %p357 = scmp.eq.s32.totalorder %s31, 1
      %p358 = por %p356, %p357
      %p360 = scmp.ne.s32.totalorder %s343, %s359
      %p361 = scmp.eq.s32.totalorder %s31, 0
      %p362 = por %p360, %p361
      %p363 = scmp.le.s32.totalorder 1, %s25
      %p364 = scmp.lt.s32.totalorder %s25, 3
      %p365 = pnand %p363, %p364
      %p366 = pneg %p365
      // Predicated region
      $region9: #{tpu_custom_call.1} parent=5 // pred_check
        _
      $region10: #{tpu_custom_call.1} parent=5 // pred_check_branch
        %368 = sbr.rel (%p365) target = $region12
      $region11: #{tpu_custom_call.1} parent=5 // pred_region
        %s369 = ssub.s32 %s25, 1
        // Predicated region
        $region13: #{tpu_custom_call.1} parent=11 // pred_check
          %p370 = pneg %p98
        $region14: #{tpu_custom_call.1} parent=11 // pred_check_branch
          %372 = sbr.rel (%p370) target = $region16
        $region15: #{tpu_custom_call.1} parent=11 // pred_region
          _
        $region16: #{tpu_custom_call.1} parent=11 // pred_fallthru
          _
        // Predicated region
        $region17: #{tpu_custom_call.1} parent=11 // pred_check
          %p373 = pneg %p119
        $region18: #{tpu_custom_call.1} parent=11 // pred_check_branch
          %375 = sbr.rel (%p373) target = $region20
        $region19: #{tpu_custom_call.1} parent=11 // pred_region
          _
        $region20: #{tpu_custom_call.1} parent=11 // pred_fallthru
          _
        // Predicated region
        $region21: #{tpu_custom_call.1} parent=11 // pred_check
          %p376 = pneg %p140
        $region22: #{tpu_custom_call.1} parent=11 // pred_check_branch
          %378 = sbr.rel (%p376) target = $region24
        $region23: #{tpu_custom_call.1} parent=11 // pred_region
          _
        $region24: #{tpu_custom_call.1} parent=11 // pred_fallthru
          _
        // Predicated region
        $region25: #{tpu_custom_call.1} parent=11 // pred_check
          %p379 = pneg %p161
        $region26: #{tpu_custom_call.1} parent=11 // pred_check_branch
          %381 = sbr.rel (%p379) target = $region28
        $region27: #{tpu_custom_call.1} parent=11 // pred_region
          _
        $region28: #{tpu_custom_call.1} parent=11 // pred_fallthru
          _
        // Predicated region
        $region29: #{tpu_custom_call.1} parent=11 // pred_check
          %p382 = pneg %p182
        $region30: #{tpu_custom_call.1} parent=11 // pred_check_branch
          %384 = sbr.rel (%p382) target = $region32
        $region31: #{tpu_custom_call.1} parent=11 // pred_region
          _
        $region32: #{tpu_custom_call.1} parent=11 // pred_fallthru
          _
        // Predicated region
        $region33: #{tpu_custom_call.1} parent=11 // pred_check
          %p385 = pneg %p203
        $region34: #{tpu_custom_call.1} parent=11 // pred_check_branch
          %387 = sbr.rel (%p385) target = $region36
        $region35: #{tpu_custom_call.1} parent=11 // pred_region
          _
        $region36: #{tpu_custom_call.1} parent=11 // pred_fallthru
          _
        // Predicated region
        $region37: #{tpu_custom_call.1} parent=11 // pred_check
          %p388 = pneg %p224
        $region38: #{tpu_custom_call.1} parent=11 // pred_check_branch
          %390 = sbr.rel (%p388) target = $region40
        $region39: #{tpu_custom_call.1} parent=11 // pred_region
          _
        $region40: #{tpu_custom_call.1} parent=11 // pred_fallthru
          _
        // Predicated region
        $region41: #{tpu_custom_call.1} parent=11 // pred_check
          %p391 = pneg %p245
        $region42: #{tpu_custom_call.1} parent=11 // pred_check_branch
          %393 = sbr.rel (%p391) target = $region44
        $region43: #{tpu_custom_call.1} parent=11 // pred_region
          _
        $region44: #{tpu_custom_call.1} parent=11 // pred_fallthru
          _
        // Predicated region
        $region45: #{tpu_custom_call.1} parent=11 // pred_check
          %p394 = pneg %p266
        $region46: #{tpu_custom_call.1} parent=11 // pred_check_branch
          %396 = sbr.rel (%p394) target = $region48
        $region47: #{tpu_custom_call.1} parent=11 // pred_region
          _
        $region48: #{tpu_custom_call.1} parent=11 // pred_fallthru
          _
        // Predicated region
        $region49: #{tpu_custom_call.1} parent=11 // pred_check
          %p397 = pneg %p287
        $region50: #{tpu_custom_call.1} parent=11 // pred_check_branch
          %399 = sbr.rel (%p397) target = $region52
        $region51: #{tpu_custom_call.1} parent=11 // pred_region
          _
        $region52: #{tpu_custom_call.1} parent=11 // pred_fallthru
          _
        // Predicated region
        $region53: #{tpu_custom_call.1} parent=11 // pred_check
          %p400 = pneg %p308
        $region54: #{tpu_custom_call.1} parent=11 // pred_check_branch
          %402 = sbr.rel (%p400) target = $region56
        $region55: #{tpu_custom_call.1} parent=11 // pred_region
          _
        $region56: #{tpu_custom_call.1} parent=11 // pred_fallthru
          _
        // Predicated region
        $region57: #{tpu_custom_call.1} parent=11 // pred_check
          %p403 = pneg %p329
        $region58: #{tpu_custom_call.1} parent=11 // pred_check_branch
          %405 = sbr.rel (%p403) target = $region60
        $region59: #{tpu_custom_call.1} parent=11 // pred_region
          _
        $region60: #{tpu_custom_call.1} parent=11 // pred_fallthru
          _
      $region12: #{tpu_custom_call.1} parent=5 // pred_fallthru
        _
      %p406 = scmp.lt.s32.totalorder %s25, 2
      // Predicated region
      $region61: #{tpu_custom_call.1} parent=5 // pred_check
        %p407 = pneg %p406
      $region62: #{tpu_custom_call.1} parent=5 // pred_check_branch
        %409 = sbr.rel (%p407) target = $region64
      $region63: #{tpu_custom_call.1} parent=5 // pred_region
        // Predicated region
        $region65: #{tpu_custom_call.1} parent=63 // pred_check
          %p410 = pneg %p45
        $region66: #{tpu_custom_call.1} parent=63 // pred_check_branch
          %412 = sbr.rel (%p410) target = $region68
        $region67: #{tpu_custom_call.1} parent=63 // pred_region
          %p413 = scmp.lt.s32.totalorder %s25, 1
          %s414 = scalar_select %p413, %s25, 1
          %s415 = scalar_lea.vmem %s0, %s414
        $region68: #{tpu_custom_call.1} parent=63 // pred_fallthru
          _
        // Predicated region
        $region69: #{tpu_custom_call.1} parent=63 // pred_check
          %p416 = pneg %p71
        $region70: #{tpu_custom_call.1} parent=63 // pred_check_branch
          %418 = sbr.rel (%p416) target = $region72
        $region71: #{tpu_custom_call.1} parent=63 // pred_region
          %p419 = scmp.lt.s32.totalorder %s25, 1
          %s420 = scalar_select %p419, %s25, 1
          %s421 = scalar_lea.vmem %s1, %s420
        $region72: #{tpu_custom_call.1} parent=63 // pred_fallthru
          _
      $region64: #{tpu_custom_call.1} parent=5 // pred_fallthru
        _
      %p422 = scmp.le.s32.totalorder 1, %s25
      %p423 = scmp.lt.s32.totalorder %s25, 3
      %p424 = pnand %p422, %p423
      %p425 = pneg %p424
      // Predicated region
      $region73: #{tpu_custom_call.1} parent=5 // pred_check
        _
      $region74: #{tpu_custom_call.1} parent=5 // pred_check_branch
        %427 = sbr.rel (%p424) target = $region76
      $region75: #{tpu_custom_call.1} parent=5 // pred_region
        %s428 = ssub.s32 %s25, 1
        %p429 = scmp.lt.s32.totalorder %s30, 1
        %s430 = scalar_select %p429, %s30, 1
        %s431 = scalar_lea.vmem %s0, %s430
        %p432 = pneg %p51
        %p433 = pneg %p48
        %p434 = scmp.lt.s32.totalorder %s30, 1
        %s435 = scalar_select %p434, %s30, 1
        %s436 = scalar_lea.vmem %s1, %s435
        %p437 = pneg %p77
        %p438 = pneg %p74
        %p439 = pneg %p98
        %p440 = pneg %p95
        %p441 = pneg %p119
        %p442 = pneg %p116
        %p443 = pneg %p140
        %p444 = pneg %p137
        %p445 = pneg %p161
        %p446 = pneg %p158
        %p447 = pneg %p182
        %p448 = pneg %p179
        %p449 = pneg %p203
        %p450 = pneg %p200
        %p451 = pneg %p224
        %p452 = pneg %p221
        %p453 = pneg %p245
        %p454 = pneg %p242
        %p455 = pneg %p266
        %p456 = pneg %p263
        %p457 = pneg %p287
        %p458 = pneg %p284
        %p459 = pneg %p308
        %p460 = pneg %p305
        %p461 = pneg %p329
        %p462 = pneg %p326
        %p463 = pneg %p355
        %p464 = pneg %p352
        %s465 = sand.u32 %s342, 1
        %s466 = scalar_lea.sflag [#allocation4], %s465
        %s467 = sand.u32 %s342, 1
        %s468 = scalar_lea.vmem [#allocation3], %s467
        %p469 = scmp.lt.s32.totalorder %s30, 1
        %s470 = scalar_select %p469, %s30, 1
        %s471 = scalar_lea.vmem %s0, %s470
        %p472 = scmp.lt.s32.totalorder %s30, 1
        %s473 = scalar_select %p472, %s30, 1
        %s474 = scalar_lea.vmem %s1, %s473
        %v476 = vld [vmem:[%s471] sm:$0x1]
        %v477 = vlaneseq
        %v478 = vshrl.u32 %v477, 7
        %v479 = vadd.s32 %v478, 8
        %v480 = vadd.s32 %v478, 16
        %v481 = vadd.s32 %v478, 24
        %v482 = vperm.slane %v476, 0
        %vm483 = vcmp.eq.s32.totalorder %v478, %v482
        %vm484 = vcmp.eq.s32.totalorder %v479, %v482
        %vm485 = vcmp.eq.s32.totalorder %v480, %v482
        %vm486 = vcmp.eq.s32.totalorder %v481, %v482
        %v487 = vsel %vm483, 1, 0
        %v488 = vsel %vm484, 1, 0
        %v489 = vsel %vm485, 1, 0
        %v490 = vsel %vm486, 1, 0
        %v491 = vcvt.s32.f32 %v487
        %v492 = vcvt.s32.f32 %v488
        %v493 = vcvt.s32.f32 %v489
        %v494 = vcvt.s32.f32 %v490
        %v495 = vld [vmem:[%s474] sm:$0x1]
        %v496 = vadd.s32 %v478, 32
        %v497 = vadd.s32 %v478, 40
        %v498 = vadd.s32 %v478, 48
        %v499 = vadd.s32 %v478, 56
        %v500 = vperm.slane %v495, 0
        %vm501 = vcmp.eq.s32.totalorder %v478, %v500
        %vm502 = vcmp.eq.s32.totalorder %v479, %v500
        %vm503 = vcmp.eq.s32.totalorder %v480, %v500
        %vm504 = vcmp.eq.s32.totalorder %v481, %v500
        %vm505 = vcmp.eq.s32.totalorder %v496, %v500
        %vm506 = vcmp.eq.s32.totalorder %v497, %v500
        %vm507 = vcmp.eq.s32.totalorder %v498, %v500
        %vm508 = vcmp.eq.s32.totalorder %v499, %v500
        %v509 = vsel %vm501, 1, 0
        %v510 = vsel %vm502, 1, 0
        %v511 = vsel %vm503, 1, 0
        %v512 = vsel %vm504, 1, 0
        %v513 = vsel %vm505, 1, 0
        %v514 = vsel %vm506, 1, 0
        %v515 = vsel %vm507, 1, 0
        %v516 = vsel %vm508, 1, 0
        %v517 = vcvt.s32.f32 %v509
        %v518 = vcvt.s32.f32 %v510
        %v519 = vcvt.s32.f32 %v511
        %v520 = vcvt.s32.f32 %v512
        %v521 = vcvt.s32.f32 %v513
        %v522 = vcvt.s32.f32 %v514
        %v523 = vcvt.s32.f32 %v515
        %v524 = vcvt.s32.f32 %v516
        %v525 = vld [vmem:[%s2] sm:$0xff]
        %v526 = vld [vmem:[%s2 + $0x8] sm:$0xff]
        %v527 = vld [vmem:[%s2 + $0x10] sm:$0xff]
        %v528 = vld [vmem:[%s2 + $0x18] sm:$0xff]
        %v529 = vld [vmem:[%s2 + $0x20] sm:$0xff]
        %vm530 = vcmask 261120
        %v532 = vsel %vm530, %v525, 0
        %v535 = vsel %vm530, %v526, 0
        %v538 = vsel %vm530, %v527, 0
        %v541 = vsel %vm530, %v528, 0
        %v544 = vsel %vm530, %v529, 0
        %546 = vmatpush.msra.mxu0 0.0
        %547 = vmatpush.msra.mxu0 0.0
        %548 = vmatpush.msra.mxu0 0.0
        %549 = vmatpush.msra.mxu0 0.0
        %550 = vmatpush.msra.mxu0 0.0
        %551 = vmatpush.msra.mxu0 0.0
        %552 = vmatpush.msra.mxu0 0.0
        %553 = vmatpush.msra.mxu0 0.0
        %554 = vmatpush.msra.mxu0 0.0
        %555 = vmatpush.msra.mxu0 0.0
        %556 = vmatpush.msra.mxu0 0.0
        %557 = vmatpush.msra.mxu0 0.0
        %558 = vmatpush.msra.mxu0 %v494
        %559 = vmatpush.msra.mxu0 %v493
        %560 = vmatpush.msra.mxu0 %v492
        %561 = vmatpush.msra.mxu0 %v491
        %562 = vmatmul.f32.gmra.mxu0 %v532
        %v563 = vpop.f32.mrf.mxu0
        %v564 = vadd.f32 0.0, %v563
        %565 = vmatmul.f32.gmra.mxu0 %v535
        %v566 = vpop.f32.mrf.mxu0
        %v567 = vadd.f32 0.0, %v566
        %568 = vmatmul.f32.gmra.mxu0 %v538
        %v569 = vpop.f32.mrf.mxu0
        %v570 = vadd.f32 0.0, %v569
        %571 = vmatmul.f32.gmra.mxu0 %v541
        %v572 = vpop.f32.mrf.mxu0
        %v573 = vadd.f32 0.0, %v572
        %574 = vmatmul.f32.gmra.mxu0 %v544
        %v575 = vpop.f32.mrf.mxu0
        %v576 = vadd.f32 0.0, %v575
        %577 = vdwg.mxu0
        %v578 = vld [vmem:[%s3] sm:$0xff]
        %v579 = vld [vmem:[%s3 + $0x8] sm:$0xff]
        %v580 = vld [vmem:[%s3 + $0x10] sm:$0xff]
        %v581 = vld [vmem:[%s3 + $0x18] sm:$0xff]
        %v582 = vld [vmem:[%s3 + $0x20] sm:$0xff]
        %vm583 = vcmask 523264
        %v585 = vsel %vm583, %v578, 0
        %v588 = vsel %vm583, %v579, 0
        %v591 = vsel %vm583, %v580, 0
        %v594 = vsel %vm583, %v581, 0
        %v597 = vsel %vm583, %v582, 0
        %599 = vmatpush.msra.mxu0 0.0
        %600 = vmatpush.msra.mxu0 0.0
        %601 = vmatpush.msra.mxu0 0.0
        %602 = vmatpush.msra.mxu0 0.0
        %603 = vmatpush.msra.mxu0 0.0
        %604 = vmatpush.msra.mxu0 0.0
        %605 = vmatpush.msra.mxu0 0.0
        %606 = vmatpush.msra.mxu0 0.0
        %607 = vmatpush.msra.mxu0 %v524
        %608 = vmatpush.msra.mxu0 %v523
        %609 = vmatpush.msra.mxu0 %v522
        %610 = vmatpush.msra.mxu0 %v521
        %611 = vmatpush.msra.mxu0 %v520
        %612 = vmatpush.msra.mxu0 %v519
        %613 = vmatpush.msra.mxu0 %v518
        %614 = vmatpush.msra.mxu0 %v517
        %615 = vmatmul.f32.gmra.mxu0 %v585
        %v616 = vpop.f32.mrf.mxu0
        %v617 = vadd.f32 0.0, %v616
        %618 = vmatmul.f32.gmra.mxu0 %v588
        %v619 = vpop.f32.mrf.mxu0
        %v620 = vadd.f32 0.0, %v619
        %621 = vmatmul.f32.gmra.mxu0 %v591
        %v622 = vpop.f32.mrf.mxu0
        %v623 = vadd.f32 0.0, %v622
        %624 = vmatmul.f32.gmra.mxu0 %v594
        %v625 = vpop.f32.mrf.mxu0
        %v626 = vadd.f32 0.0, %v625
        %627 = vmatmul.f32.gmra.mxu0 %v597
        %v628 = vpop.f32.mrf.mxu0
        %v629 = vadd.f32 0.0, %v628
        %630 = vdwg.mxu0
        %v631 = vmul.f32 %v564, %v617
        %v632 = vpack.c.bf16 %v570, %v567
        %v633 = vpack.c.bf16 %v576, %v573
        %v634 = vpack.c.bf16 %v623, %v620
        %v635 = vpack.c.bf16 %v629, %v626
        %v636 = vld [vmem:[%s4] sm:$0xf]
        %v637 = vld [vmem:[%s4 + $0x4] sm:$0xf]
        %v638 = vld [vmem:[%s4 + $0x8] sm:$0xf]
        %v639 = vld [vmem:[%s4 + $0xc] sm:$0xf]
        %v640 = vld [vmem:[%s5] sm:$0xf]
        %v641 = vld [vmem:[%s5 + $0x4] sm:$0xf]
        %v642 = vld [vmem:[%s5 + $0x8] sm:$0xf]
        %v643 = vld [vmem:[%s5 + $0xc] sm:$0xf]
        %v648 = vunpack.c.l.b16 %v640
        %v649 = vunpack.c.l.b16 %v641
        %v650 = vunpack.c.l.b16 %v642
        %v651 = vunpack.c.l.b16 %v643
        %v652 = vpack.c.b16 %v649, %v648
        %v653 = vpack.c.b16 %v651, %v650
        %v655 = vsel %vm530, %v652, 0
        %v658 = vsel %vm530, %v653, 0
        %660 = vmatpush.bf16.msra.mxu0 0
        %661 = vmatpush.bf16.msra.mxu0 0
        %662 = vmatpush.bf16.msra.mxu0 0
        %663 = vmatpush.bf16.msra.mxu0 0
        %664 = vmatpush.bf16.msra.mxu0 0
        %665 = vmatpush.bf16.msra.mxu0 0
        %666 = vmatpush.bf16.msra.mxu0 %v635
        %667 = vmatpush.bf16.msra.mxu0 %v634
        %668 = vmatmul.bf16.gmra.mxu0 %v655
        %v669 = vpop.f32.mrf.mxu0
        %v670 = vadd.f32 0.0, %v669
        %v671 = vpop.f32.mrf.mxu0
        %v672 = vadd.f32 0.0, %v671
        %673 = vmatmul.bf16.gmra.mxu0 %v658
        %v674 = vpop.f32.mrf.mxu0
        %v675 = vadd.f32 0.0, %v674
        %v676 = vpop.f32.mrf.mxu0
        %v677 = vadd.f32 0.0, %v676
        %678 = vdwg.mxu0
        %v683 = vunpack.c.l.b16 %v636
        %v684 = vunpack.c.l.b16 %v637
        %v685 = vunpack.c.l.b16 %v638
        %v686 = vunpack.c.l.b16 %v639
        %v687 = vpack.c.b16 %v684, %v683
        %v688 = vpack.c.b16 %v686, %v685
        %v690 = vsel %vm530, %v687, 0
        %v693 = vsel %vm530, %v688, 0
        %695 = vmatpush.bf16.msra.mxu0 0
        %696 = vmatpush.bf16.msra.mxu0 0
        %697 = vmatpush.bf16.msra.mxu0 0
        %698 = vmatpush.bf16.msra.mxu0 0
        %699 = vmatpush.bf16.msra.mxu0 0
        %700 = vmatpush.bf16.msra.mxu0 0
        %701 = vmatpush.bf16.msra.mxu0 %v633
        %702 = vmatpush.bf16.msra.mxu0 %v632
        %703 = vmatmul.bf16.gmra.mxu0 %v690
        %v704 = vpop.f32.mrf.mxu0
        %v705 = vadd.f32 %v670, %v704
        %v706 = vpop.f32.mrf.mxu0
        %v707 = vadd.f32 %v672, %v706
        %708 = vmatmul.bf16.gmra.mxu0 %v693
        %v709 = vpop.f32.mrf.mxu0
        %v710 = vadd.f32 %v675, %v709
        %v711 = vpop.f32.mrf.mxu0
        %v712 = vadd.f32 %v677, %v711
        %713 = vdwg.mxu0
        %v714 = vld [vmem:[%s6] sm:$0xff]
        %v715 = vld [vmem:[%s6 + $0x8] sm:$0xff]
        %v716 = vld [vmem:[%s6 + $0x10] sm:$0xff]
        %v717 = vld [vmem:[%s6 + $0x18] sm:$0xff]
        %719 = vset.pattern.permute.xlu0 0
        %720 = vperm.xlu0 %719, %v714
        %v721 = vpop.permute.xlu0 %720
        %724 = vset.pattern.permute.xlu0 0
        %725 = vperm.xlu0 %724, %v715
        %v726 = vpop.permute.xlu0 %725
        %729 = vset.pattern.permute.xlu0 0
        %730 = vperm.xlu0 %729, %v716
        %v731 = vpop.permute.xlu0 %730
        %734 = vset.pattern.permute.xlu0 0
        %735 = vperm.xlu0 %734, %v717
        %v736 = vpop.permute.xlu0 %735
        %v738 = vadd.f32 %v705, %v721
        %v739 = vadd.f32 %v707, %v726
        %v740 = vadd.f32 %v710, %v731
        %v741 = vadd.f32 %v712, %v736
        %v742 = vmax.f32 %v738, 0.0
        %v743 = vmax.f32 %v739, 0.0
        %v744 = vmax.f32 %v740, 0.0
        %v745 = vmax.f32 %v741, 0.0
        %v746 = vld [vmem:[%s7] sm:$0xf]
        %v747 = vld [vmem:[%s7 + $0x4] sm:$0xf]
        %v748 = vpack.c.bf16 %v743, %v742
        %v749 = vpack.c.bf16 %v745, %v744
        %v750 = vld [vmem:[%s8] sm:$0xff]
        %v751 = vld [vmem:[%s8 + $0x8] sm:$0xff]
        %753 = vset.pattern.permute.xlu0 0
        %754 = vperm.xlu0 %753, %v750
        %v755 = vpop.permute.xlu0 %754
        %758 = vset.pattern.permute.xlu0 0
        %759 = vperm.xlu0 %758, %v751
        %v760 = vpop.permute.xlu0 %759
        %v764 = vunpack.c.l.b16 %v746
        %v765 = vunpack.c.l.b16 %v747
        %v766 = vpack.c.b16 %v765, %v764
        %v768 = vsel %vm530, %v766, 0
        %770 = vmatpush.bf16.msra.mxu0 0
        %771 = vmatpush.bf16.msra.mxu0 0
        %772 = vmatpush.bf16.msra.mxu0 0
        %773 = vmatpush.bf16.msra.mxu0 0
        %774 = vmatpush.bf16.msra.mxu0 0
        %775 = vmatpush.bf16.msra.mxu0 0
        %776 = vmatpush.bf16.msra.mxu0 %v749
        %777 = vmatpush.bf16.msra.mxu0 %v748
        %778 = vmatmul.bf16.gmra.mxu0 %v768
        %v779 = vpop.f32.mrf.mxu0
        %v780 = vadd.f32 %v755, %v779
        %v781 = vpop.f32.mrf.mxu0
        %v782 = vadd.f32 %v760, %v781
        %783 = vdwg.mxu0
        %v784 = vmax.f32 %v780, 0.0
        %v785 = vmax.f32 %v782, 0.0
        %v786 = vld [vmem:[%s9] sm:$0xf]
        %v787 = vpack.c.bf16 %v785, %v784
        %v788 = vld [vmem:[%s10] sm:$0xff]
        %790 = vset.pattern.permute.xlu0 0
        %791 = vperm.xlu0 %790, %v788
        %v792 = vpop.permute.xlu0 %791
        %vm794 = vcmask 130048
        %v796 = vsel %vm794, %v786, 0
        %798 = vmatpush.bf16.msra.mxu0 0
        %799 = vmatpush.bf16.msra.mxu0 0
        %800 = vmatpush.bf16.msra.mxu0 0
        %801 = vmatpush.bf16.msra.mxu0 0
        %802 = vmatpush.bf16.msra.mxu0 0
        %803 = vmatpush.bf16.msra.mxu0 0
        %804 = vmatpush.bf16.msra.mxu0 0
        %805 = vmatpush.bf16.msra.mxu0 %v787
        %806 = vmatmul.bf16.gmra.mxu0 %v796
        %v807 = vpop.f32.mrf.mxu0
        %v808 = vadd.f32 %v792, %v807
        %v809 = vpop.f32.mrf.mxu0
        %810 = vdwg.mxu0
        %v811 = vmax.f32 %v808, 0.0
        %v812 = vld [vmem:[%s11] sm:$0xff]
        %814 = vset.pattern.permute.xlu0 0
        %815 = vperm.xlu0 %814, %v812
        %v816 = vpop.permute.xlu0 %815
        %v818 = vmul.f32 %v631, %v816
        %v819 = vrot.slane %v818, 4
        %v820 = vadd.f32 %v818, %v819
        %v821 = vrot.slane %v820, 2
        %v822 = vadd.f32 %v820, %v821
        %v823 = vrot.slane %v822, 1
        %v824 = vadd.f32 %v822, %v823
        %v825 = vld [vmem:[%s12] sm:$0xff]
        %827 = vset.pattern.permute.xlu0 0
        %828 = vperm.xlu0 %827, %v825
        %v829 = vpop.permute.xlu0 %828
        %v831 = vmul.f32 %v811, %v829
        %v832 = vrot.slane %v831, 4
        %v833 = vadd.f32 %v831, %v832
        %v834 = vrot.slane %v833, 2
        %v835 = vadd.f32 %v833, %v834
        %v836 = vrot.slane %v835, 1
        %v837 = vadd.f32 %v835, %v836
        %v838 = vadd.f32 %v824, %v837
        %v839 = vld [vmem:[#allocation2] sm:$0x1]
        %841 = vset.pattern.permute.xlu0 0
        %842 = vperm.xlu0 %841, %v839
        %v843 = vpop.permute.xlu0 %842
        %v845 = vperm.slane %v843, 0
        %v846 = vadd.f32 %v838, %v845
        %v847 = vxor.u32 %v846, 2147483648
        %v848 = vmul.f32 %v847, 1.442695
        %v849 = vpow.pop %v848
        %v850 = vadd.f32 %v849, 1.0
        %v851 = vrcp.pop %v850
        %v852 = vmul.f32 %v850, %v851
        %v853 = vsub.f32 1.0, %v852
        %v854 = vmul.f32 %v851, %v853
        %v855 = vadd.f32 %v851, %v854
        %vm856 = vweird.f32 %v850
        %vm857 = vweird.f32 %v851
        %vm858 = vmor %vm856, %vm857
        %v859 = vsel %vm858, %v851, %v855
        %v860 = vand.u32 2147483647, %v850
        %vm861 = vcmp.eq.f32.partialorder %v860, 8.507059e+37
        %v862 = vand.u32 %v850, 2147483648
        %v863 = vor.u32 1.1754944e-38, %v862
        %v864 = vsel %vm861, %v863, %v859
        %v865 = vmul.f32 1.0, %v864
        %866 = vst [vmem:[%s468] sm:$0x1] %v865
        %s867 = sand.u32 %s342, 1
        %s868 = scalar_lea.sflag [#allocation4], %s867
        %s869 = sand.u32 %s342, 1
        %s870 = scalar_lea.vmem [#allocation3], %s869
        // Predicated region
        $region77: #{tpu_custom_call.1} parent=75 // pred_check
          %p871 = pneg %p352
        $region78: #{tpu_custom_call.1} parent=75 // pred_check_branch
          %873 = sbr.rel (%p871) target = $region80
        $region79: #{tpu_custom_call.1} parent=75 // pred_region
          %875 = vsyncadd %s868, 0
          %s876 = scalar_lea.hbm %s14, %s30
          %s878 = sshll.u32 %s870, 4
          %s879 = int_to_ptr.vmem [resolvable:$true] %s878
          %s880 = sshll.u32 %s876, 4
          %s881 = int_to_ptr.hbm [resolvable:$true] %s880
          %883 = dma.vmem_to_hbm [thread:$0]  %s879, 16, %s881, %s868
        $region80: #{tpu_custom_call.1} parent=75 // pred_fallthru
          _
      $region76: #{tpu_custom_call.1} parent=5 // pred_fallthru
        _
      %p884 = scmp.le.s32.totalorder 2, %s25
      // Predicated region
      $region81: #{tpu_custom_call.1} parent=5 // pred_check
        %p885 = pneg %p884
      $region82: #{tpu_custom_call.1} parent=5 // pred_check_branch
        %887 = sbr.rel (%p885) target = $region84
      $region83: #{tpu_custom_call.1} parent=5 // pred_region
        %s888 = ssub.s32 %s25, 2
        // Predicated region
        $region85: #{tpu_custom_call.1} parent=83 // pred_check
          %p889 = pneg %p358
        $region86: #{tpu_custom_call.1} parent=83 // pred_check_branch
          %891 = sbr.rel (%p889) target = $region88
        $region87: #{tpu_custom_call.1} parent=83 // pred_region
          %s892 = sand.u32 %s343, 1
          %s893 = scalar_lea.sflag [#allocation4], %s892
          %s894 = sand.u32 %s343, 1
          %s895 = scalar_lea.vmem [#allocation3], %s894
          %897 = dma.done %s893, 16
        $region88: #{tpu_custom_call.1} parent=83 // pred_fallthru
          _
      $region84: #{tpu_custom_call.1} parent=5 // pred_fallthru
        _
    $region6: #{tpu_custom_call.1} parent=1 // loop_footer
      %s29 = sadd.s32 1, %s25
    $region7: #{tpu_custom_call.1} parent=1 // loop_footer_branch
      %24 = sbr.rel target = $region3
    $region8: #{tpu_custom_call.1} parent=1 // loop_exit
      _
    %898 = vsyncpa [#allocation4], 1
    %s899 = scalar_lea.sflag [#allocation4], 1
    %900 = vsyncpa %s899, 1

</llo_original>
